<compile_context>
chip_gen: v7x
topology: tpu7x:2x2x1
jax: 0.10.0
libtpu: 0.0.40
codegen_flags: <defaults>
</compile_context>

<pallas_src>
import functools

import jax
import jax.numpy as jnp
from jax.experimental import pallas as pl
from jax.experimental.pallas import tpu as pltpu


def _round_up(x, m):
    return (x + m - 1) // m * m


def malconv_kernel(x_ref, w_ref, b_ref, out_ref, acc_ref, *, nw, tile_nw):
    """Fused conv+gate matmul with a running max over window tiles."""
    p = pl.program_id(1)            # window-split index (parallel)
    kp = pl.program_id(2)           # window-chunk index (reduction)
    n_kp = pl.num_programs(2)

    @pl.when(kp == 0)
    def _init():
        acc_ref[...] = jnp.full(acc_ref.shape, -jnp.inf, acc_ref.dtype)

    # One fused matmul: (tile_nw, W*8) x (W*8, 256), f32 accumulation.
    y = jnp.dot(x_ref[...], w_ref[...],
                preferred_element_type=jnp.float32) + b_ref[...]
    cnn = y[:, :128]
    gate = jax.nn.sigmoid(y[:, 128:])
    prod = cnn * gate                                        # (tile_nw, 128) f32

    # Mask padded window rows (global index >= true NW) to -inf before the max.
    start = (p * n_kp + kp) * tile_nw
    row = start + jax.lax.broadcasted_iota(jnp.int32, prod.shape, 0)
    prod = jnp.where(row < nw, prod, -jnp.inf)

    acc_ref[...] = jnp.maximum(acc_ref[...],
                               jnp.max(prod, axis=0, keepdims=True))

    @pl.when(kp == n_kp - 1)
    def _store():
        out_ref[...] = acc_ref[...].reshape(out_ref.shape)


@functools.partial(jax.jit, static_argnames=("window_size", "tile_nw", "n_split"))
def malconv_forward(tokens, params, window_size, tile_nw=None, n_split=2):
    B, L = tokens.shape
    W = window_size
    E = 8
    C = 128
    NW = L // W
    assert NW * W == L, "input length must be a multiple of window_size"

    if tile_nw is None:
        # Large tiles amortize per-step overhead; cap padding for short inputs.
        tile_nw = min(512, _round_up(pl.cdiv(NW, n_split), 8))
    assert tile_nw % 8 == 0, "tile_nw must be a multiple of 8 (sublane tiling)"

    NW_pad = _round_up(NW, n_split * tile_nw)
    Kp = NW_pad // (n_split * tile_nw)
    n_blk = NW_pad // tile_nw
    L_pad = NW_pad * W
    WF = W * E                                   # interleaved per-window row width

    # Embedding gather (bf16) on padded tokens; the per-window conv-input rows
    # are a pure reshape of the gather output (zero extra data movement).
    table = params["embed"].astype(jnp.bfloat16)
    if L_pad != L:
        tokens = jnp.pad(tokens, ((0, 0), (0, L_pad - L)))   # padding token 0
    x = table[tokens].reshape(B * NW_pad, WF)                # (B*NW_pad, W*8) bf16

    # Fused block-structured conv weight: channels 0-3 feed cols 0..127
    # (conv_1), channels 4-7 feed cols 128..255 (conv_2 / gate). Row layout
    # matches the interleaved flat input index t*8 + c.
    def fused_conv_w(w1, w2):                                # each (128, 4, W)
        z = jnp.zeros((C, 4, W), jnp.float32)
        w = jnp.concatenate([jnp.concatenate([w1, z], axis=1),
                             jnp.concatenate([z, w2], axis=1)], axis=0)  # (256,8,W)
        return jnp.transpose(w, (2, 1, 0)).reshape(WF, 2 * C).astype(jnp.bfloat16)

    wf = fused_conv_w(params["conv1_w"], params["conv2_w"])
    bf = jnp.concatenate([params["conv1_b"], params["conv2_b"]]).reshape(1, 2 * C)

    # Explicit VMEM budget: double-buffered stream tile + fused weight, capped
    # at 48 MiB so it is portable to v7x's 64 MiB VMEM with headroom.
    stream_buf = 2 * tile_nw * WF * 2
    weight_buf = 2 * WF * (2 * C) * 2
    vmem_limit = int(min(48 * 2**20, max(16 * 2**20, stream_buf + weight_buf + (4 << 20))))

    out = pl.pallas_call(
        functools.partial(malconv_kernel, nw=NW, tile_nw=tile_nw),
        out_shape=jax.ShapeDtypeStruct((n_split, B, 1, C), jnp.float32),
        grid_spec=pltpu.PrefetchScalarGridSpec(
            num_scalar_prefetch=0,
            grid=(B, n_split, Kp),
            in_specs=[
                pl.BlockSpec((tile_nw, WF),
                             lambda b, p, kp: (b * n_blk + p * Kp + kp, 0)),
                pl.BlockSpec((WF, 2 * C), lambda b, p, kp: (0, 0)),   # resident
                pl.BlockSpec((1, 2 * C), lambda b, p, kp: (0, 0)),    # resident
            ],
            out_specs=pl.BlockSpec((1, 1, 1, C), lambda b, p, kp: (p, b, 0, 0)),
            scratch_shapes=[pltpu.VMEM((1, C), jnp.float32)],
        ),
        compiler_params=pltpu.CompilerParams(
            dimension_semantics=("parallel", "parallel", "arbitrary"),
            vmem_limit_bytes=vmem_limit),
    )(x, wf, bf)

    # Combine the n_split partial maxima, then the tiny FC epilogue in XLA.
    pooled = jnp.max(out, axis=0).reshape(B, C)              # (B, 128)
    h = pooled @ params["fc1_w"].T + params["fc1_b"]
    return h @ params["fc2_w"].T + params["fc2_b"]           # (B, 1) logit


def malconv_ref(tokens, params, W):
    """Pure-JAX f32 reference mirroring the PyTorch forward."""
    emb = params["embed"][tokens]                            # (B, L, 8)
    x = jnp.transpose(emb, (0, 2, 1))                        # (B, 8, L)

    def conv(xc, w, b):                                      # xc (B,4,L), w (128,4,W)
        B, Cc, L = xc.shape
        NW = L // W
        xw = xc.reshape(B, Cc, NW, W)
        return jnp.einsum("bcnw,ocw->bon", xw, w) + b[None, :, None]

    cnn = conv(x[:, :4], params["conv1_w"], params["conv1_b"])
    gate = jax.nn.sigmoid(conv(x[:, 4:], params["conv2_w"], params["conv2_b"]))
    y = jnp.max(cnn * gate, axis=-1)                         # MaxPool1d over NW
    h = y @ params["fc1_w"].T + params["fc1_b"]
    return h @ params["fc2_w"].T + params["fc2_b"]


def init_params(key, window_size):
    ks = jax.random.split(key, 8)
    W = window_size
    embed = jax.random.normal(ks[0], (257, 8), jnp.float32)
    embed = embed.at[0].set(0.0)                             # padding_idx=0
    conv_scale = 1.0 / jnp.sqrt(4.0 * W)
    fc1_scale = 1.0 / jnp.sqrt(128.0)
    return {
        "embed": embed,
        "conv1_w": jax.random.normal(ks[1], (128, 4, W), jnp.float32) * conv_scale,
        "conv1_b": jax.random.normal(ks[2], (128,), jnp.float32) * conv_scale,
        "conv2_w": jax.random.normal(ks[3], (128, 4, W), jnp.float32) * conv_scale,
        "conv2_b": jax.random.normal(ks[4], (128,), jnp.float32) * conv_scale,
        "fc1_w": jax.random.normal(ks[5], (128, 128), jnp.float32) * fc1_scale,
        "fc1_b": jax.random.normal(ks[6], (128,), jnp.float32) * fc1_scale,
        "fc2_w": jax.random.normal(ks[7], (1, 128), jnp.float32) * fc1_scale,
        "fc2_b": jnp.zeros((1,), jnp.float32),
    }


if __name__ == "__main__":
    # Small shape-consistent config: W=128, NW=24. With tile_nw=8, n_split=2
    # NW is padded 24 -> 32, so the padded-row masking, the multi-step running
    # max (Kp=2) and the 2-way parallel window split are all exercised.
    B, W, NW = 2, 128, 24
    L = NW * W
    key = jax.random.PRNGKey(0)
    k_tok, k_par = jax.random.split(key)

    # vocab = 257 fits int16; halves the wrapper gather's index traffic.
    tokens = jax.random.randint(k_tok, (B, L), 0, 257, dtype=jnp.int32).astype(jnp.int16)
    params = init_params(k_par, W)

    out = malconv_forward(tokens, params, window_size=W, tile_nw=8)
    out = jax.block_until_ready(out)

    ref = malconv_ref(tokens, params, W)
    assert out.shape == (B, 1), out.shape
    # bf16 streamed embeddings / conv weights (f32 accumulation) vs f32 ref.
    assert jnp.allclose(out, ref, rtol=2e-2, atol=2e-2), (out, ref)

    print("KERNEL_OK")
</pallas_src>

<mosaic_0001>
module attributes {stable_mosaic.version = 11 : i64} {
  func.func @malconv_kernel(%arg0: i32, %arg1: i32, %arg2: i32, %arg3: memref<8x1024xbf16, #tpu.memory_space<vmem>>, %arg4: memref<1024x256xbf16, #tpu.memory_space<vmem>>, %arg5: memref<1x256xf32, #tpu.memory_space<vmem>>, %arg6: memref<1x1x1x128xf32, #tpu.memory_space<vmem>>, %arg7: memref<1x128xf32, #tpu.memory_space<vmem>>) attributes {dimension_semantics = [#tpu.dimension_semantics<parallel>, #tpu.dimension_semantics<parallel>, #tpu.dimension_semantics<arbitrary>], iteration_bounds = array<i64: 2, 2, 2>, scalar_prefetch = 0 : i64, scratch_operands = 1 : i64, tpu.core_type = #tpu.core_type<tc>, window_params = [{transform_indices = @transform_0, window_bounds = array<i64: 8, 1024>}, {pipeline_mode = #tpu.pipeline_mode<synchronous>, transform_indices = @transform_1, window_bounds = array<i64: 1024, 256>}, {pipeline_mode = #tpu.pipeline_mode<synchronous>, transform_indices = @transform_2, window_bounds = array<i64: 1, 256>}, {transform_indices = @transform_3, window_bounds = array<i64: 1, 1, 1, 128>}]} {
    %c0_i32 = arith.constant 0 : i32
    %0 = arith.cmpi eq, %arg2, %c0_i32 : i32
    %1 = arith.extui %0 : i1 to i32
    %c0_i32_0 = arith.constant 0 : i32
    %2 = arith.cmpi ne, %1, %c0_i32_0 : i32
    scf.if %2 {
      %cst_14 = arith.constant 0xFF800000 : f32
      %35 = vector.broadcast %cst_14 : f32 to vector<1x128xf32>
      %c0_15 = arith.constant 0 : index
      %c0_16 = arith.constant 0 : index
      %36 = vector.load %arg7[%c0_15, %c0_16] : memref<1x128xf32, #tpu.memory_space<vmem>>, vector<1x128xf32>
      tpu.vector_store %arg7[%c0_15, %c0_16], %35 {strides = array<i32>} : memref<1x128xf32, #tpu.memory_space<vmem>>, vector<1x128xf32>,
    } else {
    }
    %c0 = arith.constant 0 : index
    %c0_1 = arith.constant 0 : index
    %3 = vector.load %arg3[%c0, %c0_1] : memref<8x1024xbf16, #tpu.memory_space<vmem>>, vector<8x1024xbf16>
    %c0_2 = arith.constant 0 : index
    %c0_3 = arith.constant 0 : index
    %4 = vector.load %arg4[%c0_2, %c0_3] : memref<1024x256xbf16, #tpu.memory_space<vmem>>, vector<1024x256xbf16>
    %cst = arith.constant dense<0.000000e+00> : vector<8x256xf32>
    %5 = tpu.matmul %3, %4, %cst {dimension_numbers = #tpu.dot_dimension_numbers<[1], [0], [0], [1], [0, 0, 1, 1], [], []>} : vector<8x1024xbf16>, vector<1024x256xbf16>, vector<8x256xf32> -> vector<8x256xf32>
    %c0_4 = arith.constant 0 : index
    %c0_5 = arith.constant 0 : index
    %6 = vector.load %arg5[%c0_4, %c0_5] : memref<1x256xf32, #tpu.memory_space<vmem>>, vector<1x256xf32>
    %7 = vector.broadcast %6 : vector<1x256xf32> to vector<8x256xf32>
    %8 = arith.addf %5, %7 : vector<8x256xf32>
    %9 = vector.extract_strided_slice %8 {offsets = [0, 0], sizes = [8, 128], strides = [1, 1]} : vector<8x256xf32> to vector<8x128xf32>
    %10 = vector.extract_strided_slice %8 {offsets = [0, 128], sizes = [8, 128], strides = [1, 1]} : vector<8x256xf32> to vector<8x128xf32>
    %11 = arith.negf %10 : vector<8x128xf32>
    %12 = math.exp %11 : vector<8x128xf32>
    %cst_6 = arith.constant 1.000000e+00 : f32
    %13 = vector.broadcast %cst_6 : f32 to vector<8x128xf32>
    %14 = arith.addf %13, %12 : vector<8x128xf32>
    %15 = arith.divf %13, %14 : vector<8x128xf32>
    %16 = arith.mulf %9, %15 : vector<8x128xf32>
    %c2_i32 = arith.constant 2 : i32
    %17 = arith.muli %arg1, %c2_i32 : i32
    %18 = arith.addi %17, %arg2 : i32
    %c8_i32 = arith.constant 8 : i32
    %19 = arith.muli %18, %c8_i32 : i32
    %20 = tpu.iota {dimensions = array<i32: 0>} : vector<8x128xi32>
    %21 = vector.broadcast %19 : i32 to vector<8x128xi32>
    %22 = arith.addi %21, %20 : vector<8x128xi32>
    %c24_i32 = arith.constant 24 : i32
    %23 = vector.broadcast %c24_i32 : i32 to vector<8x128xi32>
    %24 = arith.cmpi slt, %22, %23 : vector<8x128xi32>
    %cst_7 = arith.constant 0xFF800000 : f32
    %25 = vector.broadcast %cst_7 : f32 to vector<8x128xf32>
    %26 = arith.select %24, %16, %25 : vector<8x128xi1>, vector<8x128xf32>
    %c0_8 = arith.constant 0 : index
    %c0_9 = arith.constant 0 : index
    %27 = vector.load %arg7[%c0_8, %c0_9] : memref<1x128xf32, #tpu.memory_space<vmem>>, vector<1x128xf32>
    %cst_10 = arith.constant dense<0xFF800000> : vector<128xf32>
    %28 = vector.multi_reduction <maximumf>, %26, %cst_10 [0] : vector<8x128xf32> to vector<128xf32>
    %29 = vector.shape_cast %28 : vector<128xf32> to vector<1x128xf32>
    %30 = arith.maximumf %27, %29 : vector<1x128xf32>
    %c0_11 = arith.constant 0 : index
    %c0_12 = arith.constant 0 : index
    %31 = vector.load %arg7[%c0_11, %c0_12] : memref<1x128xf32, #tpu.memory_space<vmem>>, vector<1x128xf32>
    tpu.vector_store %arg7[%c0_11, %c0_12], %30 {strides = array<i32>} : memref<1x128xf32, #tpu.memory_space<vmem>>, vector<1x128xf32>,
    %c1_i32 = arith.constant 1 : i32
    %32 = arith.cmpi eq, %arg2, %c1_i32 : i32
    %33 = arith.extui %32 : i1 to i32
    %c0_i32_13 = arith.constant 0 : i32
    %34 = arith.cmpi ne, %33, %c0_i32_13 : i32
    scf.if %34 {
      %c0_14 = arith.constant 0 : index
      %c0_15 = arith.constant 0 : index
      %35 = vector.load %arg7[%c0_14, %c0_15] : memref<1x128xf32, #tpu.memory_space<vmem>>, vector<1x128xf32>
      %36 = vector.shape_cast %35 : vector<1x128xf32> to vector<1x1x1x128xf32>
      %c0_16 = arith.constant 0 : index
      %c0_17 = arith.constant 0 : index
      %c0_18 = arith.constant 0 : index
      %c0_19 = arith.constant 0 : index
      %37 = vector.load %arg6[%c0_16, %c0_17, %c0_18, %c0_19] : memref<1x1x1x128xf32, #tpu.memory_space<vmem>>, vector<1x1x1x128xf32>
      tpu.vector_store %arg6[%c0_16, %c0_17, %c0_18, %c0_19], %36 {strides = array<i32>} : memref<1x1x1x128xf32, #tpu.memory_space<vmem>>, vector<1x1x1x128xf32>,
    } else {
    }
    return
  }
  func.func @transform_0(%arg0: i32, %arg1: i32, %arg2: i32) -> (i32, i32) {
    %c4_i32 = arith.constant 4 : i32
    %0 = arith.muli %arg0, %c4_i32 : i32
    %c2_i32 = arith.constant 2 : i32
    %1 = arith.muli %arg1, %c2_i32 : i32
    %2 = arith.addi %0, %1 : i32
    %3 = arith.addi %2, %arg2 : i32
    %c0_i32 = arith.constant 0 : i32
    %c0_i32_0 = arith.constant 0 : i32
    return %3, %c0_i32 : i32, i32
  }
  func.func @transform_1(%arg0: i32, %arg1: i32, %arg2: i32) -> (i32, i32) {
    %c0_i32 = arith.constant 0 : i32
    %c0_i32_0 = arith.constant 0 : i32
    %c0_i32_1 = arith.constant 0 : i32
    return %c0_i32, %c0_i32_0 : i32, i32
  }
  func.func @transform_2(%arg0: i32, %arg1: i32, %arg2: i32) -> (i32, i32) {
    %c0_i32 = arith.constant 0 : i32
    %c0_i32_0 = arith.constant 0 : i32
    %c0_i32_1 = arith.constant 0 : i32
    return %c0_i32, %c0_i32_0 : i32, i32
  }
  func.func @transform_3(%arg0: i32, %arg1: i32, %arg2: i32) -> (i32, i32, i32, i32) {
    %c0_i32 = arith.constant 0 : i32
    %c0_i32_0 = arith.constant 0 : i32
    %c0_i32_1 = arith.constant 0 : i32
    return %arg1, %arg0, %c0_i32, %c0_i32_0 : i32, i32, i32, i32
  }
}

</mosaic_0001>

<llo_original>
// kernel: malconv_forward.1
$region0: #{malconv_forward.1}
  #allocation0 [shape = 'u32[]', space=smem, size = 0x4, offset = 0x4, fixed_abs, tag = 'smem constant byte address 0x4 - core index']
  #allocation1 [shape = 'u32[144,128]{1,0:T(1,128)}', space=vmem, size = 0x12000, scoped, tag = 'internal scratch']
  #allocation2 [shape = 'f32[1,128]{1,0:T(1,128)}', space=vmem, size = 0x200, scoped, tag = 'scratch operand']
  %s0 = inlined_call_operand.vmem [shape: bf16[64,1024], index: 0, kind: input, shape index: {}]
  %s1 = inlined_call_operand.vmem [shape: bf16[1024,256], index: 1, kind: input, shape index: {}]
  %s2 = inlined_call_operand.vmem [shape: f32[1,256], index: 2, kind: input, shape index: {}]
  %s3 = inlined_call_operand.vmem [shape: f32[2,2,1,128], index: 3, kind: output, shape index: {}]
  %s4 = sld [smem:[#allocation0]]
  $region53: #{malconv_forward.1} parent=0
    _
  %s6 = ssub.s32 1, %s4
  %s7 = scalar_select 0, %s6, %s4
  loop: start=0, step=1, limit=10
  $region2: #{malconv_forward.1} parent=0 // loop_pre_header
    _
  $region3: #{malconv_forward.1} parent=0 // loop_header
    %s9 = sphi 0, %s13
    %p10 = scmp.ge.s32.totalorder %s9, 10
    %s16 = sphi 0, %s35
    %s17 = sphi 0, %s31
    %s18 = sphi 0, %s27
    %s19 = sphi 0, %s16
    %s20 = sphi 0, %s17
    %s21 = sphi 0, %s18
    %s22 = sphi 0, %s19
    %s23 = sphi 0, %s20
    %s24 = sphi 0, %s21
    %s46 = sphi 0, %s48
    %s49 = sphi 0, %s46
    %s50 = sphi 0, %s49
    %s66 = sphi 0, %s50
    %s70 = sphi 0, %s70
    %s72 = sphi 0, %s70
    %s73 = sphi 0, %s72
    %s87 = sphi 0, %s73
    %s91 = sphi 0, %s91
    %s93 = sphi 0, %s91
    %s94 = sphi 0, %s93
    %s108 = sphi 0, %s94
    %s116 = sphi 0, %s118
    %s119 = sphi 0, %s116
    %s120 = sphi 0, %s119
    %s136 = sphi 0, %s120
  $region4: #{malconv_forward.1} parent=0 // loop_header_branch
    %12 = sbr.rel (%p10) target = $region8
  $region5: #{malconv_forward.1} parent=0 // loop_body
    %s14 = ssub.s32 %s9, 1
    %s15 = ssub.s32 %s9, 2
    %s25 = sadd.s32 1, %s18
    %p26 = scmp.ge.s32.totalorder %s25, 2
    %s27 = scalar_select %p26, 0, %s25
    %s28 = sadd.s32 1, %s17
    %s29 = scalar_select %p26, %s28, %s17
    %p30 = scmp.ge.s32.totalorder %s29, 2
    %s31 = scalar_select %p30, 0, %s29
    %s32 = sadd.s32 1, %s16
    %s33 = scalar_select %p30, %s32, %s16
    %p34 = scmp.ge.s32.totalorder %s33, 2
    %s35 = scalar_select %p34, 0, %s33
    %s36 = smul.u32 %s16, 4
    %s37 = smul.u32 %s17, 2
    %s38 = sadd.s32 %s36, %s37
    %s39 = sadd.s32 %s38, %s18
    %s40 = smul.u32 %s35, 4
    %s41 = smul.u32 %s31, 2
    %s42 = sadd.s32 %s40, %s41
    %s43 = sadd.s32 %s42, %s27
    %s44 = ssub.s32 %s39, %s43
    %p45 = scmp.eq.s32.totalorder %s44, 0
    %s47 = sadd.s32 %s46, 1
    %s48 = scalar_select %p45, %s46, %s47
    %p51 = pneg %p45
    %p52 = scmp.eq.s32.totalorder %s9, 7
    %p53 = por %p51, %p52
    %p54 = scmp.ne.s32.totalorder %s46, %s49
    %p55 = scmp.eq.s32.totalorder %s9, 0
    %p56 = por %p54, %p55
    %p57 = scmp.ne.s32.totalorder %s46, %s49
    %p58 = scmp.eq.s32.totalorder %s14, 7
    %p59 = por %p57, %p58
    %p60 = scmp.ne.s32.totalorder %s49, %s50
    %p61 = scmp.eq.s32.totalorder %s14, 0
    %p62 = por %p60, %p61
    %p63 = scmp.ne.s32.totalorder %s49, %s50
    %p64 = scmp.eq.s32.totalorder %s15, 7
    %p65 = por %p63, %p64
    %p67 = scmp.ne.s32.totalorder %s50, %s66
    %p68 = scmp.eq.s32.totalorder %s15, 0
    %p69 = por %p67, %p68
    %s71 = sadd.s32 %s70, 1
    %p74 = scmp.eq.s32.totalorder %s9, 7
    %p75 = scmp.ne.s32.totalorder %s70, %s72
    %p76 = scmp.eq.s32.totalorder %s9, 0
    %p77 = por %p75, %p76
    %p78 = scmp.ne.s32.totalorder %s70, %s72
    %p79 = scmp.eq.s32.totalorder %s14, 7
    %p80 = por %p78, %p79
    %p81 = scmp.ne.s32.totalorder %s72, %s73
    %p82 = scmp.eq.s32.totalorder %s14, 0
    %p83 = por %p81, %p82
    %p84 = scmp.ne.s32.totalorder %s72, %s73
    %p85 = scmp.eq.s32.totalorder %s15, 7
    %p86 = por %p84, %p85
    %p88 = scmp.ne.s32.totalorder %s73, %s87
    %p89 = scmp.eq.s32.totalorder %s15, 0
    %p90 = por %p88, %p89
    %s92 = sadd.s32 %s91, 1
    %p95 = scmp.eq.s32.totalorder %s9, 7
    %p96 = scmp.ne.s32.totalorder %s91, %s93
    %p97 = scmp.eq.s32.totalorder %s9, 0
    %p98 = por %p96, %p97
    %p99 = scmp.ne.s32.totalorder %s91, %s93
    %p100 = scmp.eq.s32.totalorder %s14, 7
    %p101 = por %p99, %p100
    %p102 = scmp.ne.s32.totalorder %s93, %s94
    %p103 = scmp.eq.s32.totalorder %s14, 0
    %p104 = por %p102, %p103
    %p105 = scmp.ne.s32.totalorder %s93, %s94
    %p106 = scmp.eq.s32.totalorder %s15, 7
    %p107 = por %p105, %p106
    %p109 = scmp.ne.s32.totalorder %s94, %s108
    %p110 = scmp.eq.s32.totalorder %s15, 0
    %p111 = por %p109, %p110
    %s112 = ssub.s32 %s17, %s31
    %s113 = ssub.s32 %s16, %s35
    %s114 = sor.u32 %s112, %s113
    %p115 = scmp.eq.s32.totalorder %s114, 0
    %s117 = sadd.s32 %s116, 1
    %s118 = scalar_select %p115, %s116, %s117
    %p121 = pneg %p115
    %p122 = scmp.eq.s32.totalorder %s9, 7
    %p123 = por %p121, %p122
    %p124 = scmp.ne.s32.totalorder %s116, %s119
    %p125 = scmp.eq.s32.totalorder %s9, 0
    %p126 = por %p124, %p125
    %p127 = scmp.ne.s32.totalorder %s116, %s119
    %p128 = scmp.eq.s32.totalorder %s14, 7
    %p129 = por %p127, %p128
    %p130 = scmp.ne.s32.totalorder %s119, %s120
    %p131 = scmp.eq.s32.totalorder %s14, 0
    %p132 = por %p130, %p131
    %p133 = scmp.ne.s32.totalorder %s119, %s120
    %p134 = scmp.eq.s32.totalorder %s15, 7
    %p135 = por %p133, %p134
    %p137 = scmp.ne.s32.totalorder %s120, %s136
    %p138 = scmp.eq.s32.totalorder %s15, 0
    %p139 = por %p137, %p138
    %p140 = scmp.le.s32.totalorder 1, %s9
    %p141 = scmp.lt.s32.totalorder %s9, 9
    %p142 = pnand %p140, %p141
    %p143 = pneg %p142
    // Predicated region
    $region9: #{malconv_forward.1} parent=5 // pred_check
      _
    $region10: #{malconv_forward.1} parent=5 // pred_check_branch
      %145 = sbr.rel (%p142) target = $region12
    $region11: #{malconv_forward.1} parent=5 // pred_region
      %s146 = ssub.s32 %s9, 1
      // Predicated region
      $region13: #{malconv_forward.1} parent=11 // pred_check
        %p147 = pneg %p83
      $region14: #{malconv_forward.1} parent=11 // pred_check_branch
        %149 = sbr.rel (%p147) target = $region16
      $region15: #{malconv_forward.1} parent=11 // pred_region
        _
      $region16: #{malconv_forward.1} parent=11 // pred_fallthru
        _
      // Predicated region
      $region17: #{malconv_forward.1} parent=11 // pred_check
        %p150 = pneg %p104
      $region18: #{malconv_forward.1} parent=11 // pred_check_branch
        %152 = sbr.rel (%p150) target = $region20
      $region19: #{malconv_forward.1} parent=11 // pred_region
        _
      $region20: #{malconv_forward.1} parent=11 // pred_fallthru
        _
    $region12: #{malconv_forward.1} parent=5 // pred_fallthru
      _
    %p153 = scmp.lt.s32.totalorder %s9, 8
    // Predicated region
    $region21: #{malconv_forward.1} parent=5 // pred_check
      %p154 = pneg %p153
    $region22: #{malconv_forward.1} parent=5 // pred_check_branch
      %156 = sbr.rel (%p154) target = $region24
    $region23: #{malconv_forward.1} parent=5 // pred_region
      // Predicated region
      $region25: #{malconv_forward.1} parent=23 // pred_check
        %p157 = pneg %p56
      $region26: #{malconv_forward.1} parent=23 // pred_check_branch
        %159 = sbr.rel (%p157) target = $region28
      $region27: #{malconv_forward.1} parent=23 // pred_region
        %s160 = smul.u32 %s16, 4
        %s161 = smul.u32 %s17, 2
        %s162 = sadd.s32 %s160, %s161
        %s163 = sadd.s32 %s162, %s18
        %p164 = scmp.lt.s32.totalorder %s163, 7
        %s165 = scalar_select %p164, %s163, 7
        %s166 = smul.addr %s165, 8
        %s167 = smul.addr %s166, 4
        %s168 = scalar_lea.vmem %s0, %s167
        %s169 = smul.u32 %s16, 4
        %s170 = smul.u32 %s17, 2
        %s171 = sadd.s32 %s169, %s170
        %s172 = sadd.s32 %s171, %s18
      $region28: #{malconv_forward.1} parent=23 // pred_fallthru
        _
    $region24: #{malconv_forward.1} parent=5 // pred_fallthru
      _
    %p173 = scmp.le.s32.totalorder 1, %s9
    %p174 = scmp.lt.s32.totalorder %s9, 9
    %p175 = pnand %p173, %p174
    %p176 = pneg %p175
    // Predicated region
    $region29: #{malconv_forward.1} parent=5 // pred_check
      _
    $region30: #{malconv_forward.1} parent=5 // pred_check_branch
      %178 = sbr.rel (%p175) target = $region32
    $region31: #{malconv_forward.1} parent=5 // pred_region
      %s179 = ssub.s32 %s9, 1
      %s180 = smul.u32 %s19, 4
      %s181 = smul.u32 %s20, 2
      %s182 = sadd.s32 %s180, %s181
      %s183 = sadd.s32 %s182, %s21
      %p184 = scmp.lt.s32.totalorder %s183, 7
      %s185 = scalar_select %p184, %s183, 7
      %s186 = smul.addr %s185, 8
      %s187 = smul.addr %s186, 4
      %s188 = scalar_lea.vmem %s0, %s187
      %p189 = pneg %p62
      %p190 = pneg %p59
      %p191 = pneg %p83
      %p192 = pneg %p80
      %p193 = pneg %p104
      %p194 = pneg %p101
      %p195 = pneg %p132
      %p196 = pneg %p129
      %p197 = scmp.lt.s32.totalorder %s20, 1
      %s198 = scalar_select %p197, %s20, 1
      %p199 = scmp.lt.s32.totalorder %s19, 1
      %s200 = scalar_select %p199, %s19, 1
      %s201 = smul.addr %s198, 2
      %s202 = sadd.s32 %s200, %s201
      %s203 = scalar_lea.vmem %s3, %s202
      %s204 = smul.u32 %s19, 4
      %s205 = smul.u32 %s20, 2
      %s206 = sadd.s32 %s204, %s205
      %s207 = sadd.s32 %s206, %s21
      %p208 = scmp.lt.s32.totalorder %s207, 7
      %s209 = scalar_select %p208, %s207, 7
      %s210 = smul.addr %s209, 8
      %s211 = smul.addr %s210, 4
      %s212 = scalar_lea.vmem %s0, %s211
      %s213 = smul.u32 %s19, 4
      %s214 = smul.u32 %s20, 2
      %s215 = sadd.s32 %s213, %s214
      %s216 = sadd.s32 %s215, %s21
      %p217 = scmp.lt.s32.totalorder %s20, 1
      %s218 = scalar_select %p217, %s20, 1
      %p219 = scmp.lt.s32.totalorder %s19, 1
      %s220 = scalar_select %p219, %s19, 1
      %s221 = smul.addr %s218, 2
      %s222 = sadd.s32 %s220, %s221
      %s223 = scalar_lea.vmem %s3, %s222
      %p224 = scmp.eq.s32.totalorder %s21, 0
      // Predicated region
      $region33: #{malconv_forward.1} parent=31 // pred_check
        %p225 = pneg %p224
      $region34: #{malconv_forward.1} parent=31 // pred_check_branch
        %227 = sbr.rel (%p225) target = $region36
      $region35: #{malconv_forward.1} parent=31 // pred_region
        %228 = vst [vmem:[#allocation2] sm:$0x1] -inf
      $region36: #{malconv_forward.1} parent=31 // pred_fallthru
        _
      %v229 = vld [vmem:[%s212] sm:$0xff]
      %v230 = vld [vmem:[%s212 + $0x8] sm:$0xff]
      %v231 = vld [vmem:[%s212 + $0x10] sm:$0xff]
      %v232 = vld [vmem:[%s212 + $0x18] sm:$0xff]
      %v233 = vld [vmem:[%s1] sm:$0xff]
      %v234 = vld [vmem:[%s1 + $0x8] sm:$0xff]
      %v235 = vld [vmem:[%s1 + $0x10] sm:$0xff]
      %v236 = vld [vmem:[%s1 + $0x18] sm:$0xff]
      %v237 = vld [vmem:[%s1 + $0x20] sm:$0xff]
      %v238 = vld [vmem:[%s1 + $0x28] sm:$0xff]
      %v239 = vld [vmem:[%s1 + $0x30] sm:$0xff]
      %v240 = vld [vmem:[%s1 + $0x38] sm:$0xff]
      %v241 = vld [vmem:[%s1 + $0x40] sm:$0xff]
      %v242 = vld [vmem:[%s1 + $0x48] sm:$0xff]
      %v243 = vld [vmem:[%s1 + $0x50] sm:$0xff]
      %v244 = vld [vmem:[%s1 + $0x58] sm:$0xff]
      %v245 = vld [vmem:[%s1 + $0x60] sm:$0xff]
      %v246 = vld [vmem:[%s1 + $0x68] sm:$0xff]
      %v247 = vld [vmem:[%s1 + $0x70] sm:$0xff]
      %v248 = vld [vmem:[%s1 + $0x78] sm:$0xff]
      %v249 = vld [vmem:[%s1 + $0x80] sm:$0xff]
      %v250 = vld [vmem:[%s1 + $0x88] sm:$0xff]
      %v251 = vld [vmem:[%s1 + $0x90] sm:$0xff]
      %v252 = vld [vmem:[%s1 + $0x98] sm:$0xff]
      %v253 = vld [vmem:[%s1 + $0xa0] sm:$0xff]
      %v254 = vld [vmem:[%s1 + $0xa8] sm:$0xff]
      %v255 = vld [vmem:[%s1 + $0xb0] sm:$0xff]
      %v256 = vld [vmem:[%s1 + $0xb8] sm:$0xff]
      %v257 = vld [vmem:[%s1 + $0xc0] sm:$0xff]
      %v258 = vld [vmem:[%s1 + $0xc8] sm:$0xff]
      %v259 = vld [vmem:[%s1 + $0xd0] sm:$0xff]
      %v260 = vld [vmem:[%s1 + $0xd8] sm:$0xff]
      %v261 = vld [vmem:[%s1 + $0xe0] sm:$0xff]
      %v262 = vld [vmem:[%s1 + $0xe8] sm:$0xff]
      %v263 = vld [vmem:[%s1 + $0xf0] sm:$0xff]
      %v264 = vld [vmem:[%s1 + $0xf8] sm:$0xff]
      %v265 = vld [vmem:[%s1 + $0x100] sm:$0xff]
      %v266 = vld [vmem:[%s1 + $0x108] sm:$0xff]
      %v267 = vld [vmem:[%s1 + $0x110] sm:$0xff]
      %v268 = vld [vmem:[%s1 + $0x118] sm:$0xff]
      %v269 = vld [vmem:[%s1 + $0x120] sm:$0xff]
      %v270 = vld [vmem:[%s1 + $0x128] sm:$0xff]
      %v271 = vld [vmem:[%s1 + $0x130] sm:$0xff]
      %v272 = vld [vmem:[%s1 + $0x138] sm:$0xff]
      %v273 = vld [vmem:[%s1 + $0x140] sm:$0xff]
      %v274 = vld [vmem:[%s1 + $0x148] sm:$0xff]
      %v275 = vld [vmem:[%s1 + $0x150] sm:$0xff]
      %v276 = vld [vmem:[%s1 + $0x158] sm:$0xff]
      %v277 = vld [vmem:[%s1 + $0x160] sm:$0xff]
      %v278 = vld [vmem:[%s1 + $0x168] sm:$0xff]
      %v279 = vld [vmem:[%s1 + $0x170] sm:$0xff]
      %v280 = vld [vmem:[%s1 + $0x178] sm:$0xff]
      %v281 = vld [vmem:[%s1 + $0x180] sm:$0xff]
      %v282 = vld [vmem:[%s1 + $0x188] sm:$0xff]
      %v283 = vld [vmem:[%s1 + $0x190] sm:$0xff]
      %v284 = vld [vmem:[%s1 + $0x198] sm:$0xff]
      %v285 = vld [vmem:[%s1 + $0x1a0] sm:$0xff]
      %v286 = vld [vmem:[%s1 + $0x1a8] sm:$0xff]
      %v287 = vld [vmem:[%s1 + $0x1b0] sm:$0xff]
      %v288 = vld [vmem:[%s1 + $0x1b8] sm:$0xff]
      %v289 = vld [vmem:[%s1 + $0x1c0] sm:$0xff]
      %v290 = vld [vmem:[%s1 + $0x1c8] sm:$0xff]
      %v291 = vld [vmem:[%s1 + $0x1d0] sm:$0xff]
      %v292 = vld [vmem:[%s1 + $0x1d8] sm:$0xff]
      %v293 = vld [vmem:[%s1 + $0x1e0] sm:$0xff]
      %v294 = vld [vmem:[%s1 + $0x1e8] sm:$0xff]
      %v295 = vld [vmem:[%s1 + $0x1f0] sm:$0xff]
      %v296 = vld [vmem:[%s1 + $0x1f8] sm:$0xff]
      %v297 = vld [vmem:[%s1 + $0x200] sm:$0xff]
      %v298 = vld [vmem:[%s1 + $0x208] sm:$0xff]
      %v299 = vld [vmem:[%s1 + $0x210] sm:$0xff]
      %v300 = vld [vmem:[%s1 + $0x218] sm:$0xff]
      %v301 = vld [vmem:[%s1 + $0x220] sm:$0xff]
      %v302 = vld [vmem:[%s1 + $0x228] sm:$0xff]
      %v303 = vld [vmem:[%s1 + $0x230] sm:$0xff]
      %v304 = vld [vmem:[%s1 + $0x238] sm:$0xff]
      %v305 = vld [vmem:[%s1 + $0x240] sm:$0xff]
      %v306 = vld [vmem:[%s1 + $0x248] sm:$0xff]
      %v307 = vld [vmem:[%s1 + $0x250] sm:$0xff]
      %v308 = vld [vmem:[%s1 + $0x258] sm:$0xff]
      %v309 = vld [vmem:[%s1 + $0x260] sm:$0xff]
      %v310 = vld [vmem:[%s1 + $0x268] sm:$0xff]
      %v311 = vld [vmem:[%s1 + $0x270] sm:$0xff]
      %v312 = vld [vmem:[%s1 + $0x278] sm:$0xff]
      %v313 = vld [vmem:[%s1 + $0x280] sm:$0xff]
      %v314 = vld [vmem:[%s1 + $0x288] sm:$0xff]
      %v315 = vld [vmem:[%s1 + $0x290] sm:$0xff]
      %v316 = vld [vmem:[%s1 + $0x298] sm:$0xff]
      %v317 = vld [vmem:[%s1 + $0x2a0] sm:$0xff]
      %v318 = vld [vmem:[%s1 + $0x2a8] sm:$0xff]
      %v319 = vld [vmem:[%s1 + $0x2b0] sm:$0xff]
      %v320 = vld [vmem:[%s1 + $0x2b8] sm:$0xff]
      %v321 = vld [vmem:[%s1 + $0x2c0] sm:$0xff]
      %v322 = vld [vmem:[%s1 + $0x2c8] sm:$0xff]
      %v323 = vld [vmem:[%s1 + $0x2d0] sm:$0xff]
      %v324 = vld [vmem:[%s1 + $0x2d8] sm:$0xff]
      %v325 = vld [vmem:[%s1 + $0x2e0] sm:$0xff]
      %v326 = vld [vmem:[%s1 + $0x2e8] sm:$0xff]
      %v327 = vld [vmem:[%s1 + $0x2f0] sm:$0xff]
      %v328 = vld [vmem:[%s1 + $0x2f8] sm:$0xff]
      %v329 = vld [vmem:[%s1 + $0x300] sm:$0xff]
      %v330 = vld [vmem:[%s1 + $0x308] sm:$0xff]
      %v331 = vld [vmem:[%s1 + $0x310] sm:$0xff]
      %v332 = vld [vmem:[%s1 + $0x318] sm:$0xff]
      %v333 = vld [vmem:[%s1 + $0x320] sm:$0xff]
      %v334 = vld [vmem:[%s1 + $0x328] sm:$0xff]
      %v335 = vld [vmem:[%s1 + $0x330] sm:$0xff]
      %v336 = vld [vmem:[%s1 + $0x338] sm:$0xff]
      %v337 = vld [vmem:[%s1 + $0x340] sm:$0xff]
      %v338 = vld [vmem:[%s1 + $0x348] sm:$0xff]
      %v339 = vld [vmem:[%s1 + $0x350] sm:$0xff]
      %v340 = vld [vmem:[%s1 + $0x358] sm:$0xff]
      %v341 = vld [vmem:[%s1 + $0x360] sm:$0xff]
      %v342 = vld [vmem:[%s1 + $0x368] sm:$0xff]
      %v343 = vld [vmem:[%s1 + $0x370] sm:$0xff]
      %v344 = vld [vmem:[%s1 + $0x378] sm:$0xff]
      %v345 = vld [vmem:[%s1 + $0x380] sm:$0xff]
      %v346 = vld [vmem:[%s1 + $0x388] sm:$0xff]
      %v347 = vld [vmem:[%s1 + $0x390] sm:$0xff]
      %v348 = vld [vmem:[%s1 + $0x398] sm:$0xff]
      %v349 = vld [vmem:[%s1 + $0x3a0] sm:$0xff]
      %v350 = vld [vmem:[%s1 + $0x3a8] sm:$0xff]
      %v351 = vld [vmem:[%s1 + $0x3b0] sm:$0xff]
      %v352 = vld [vmem:[%s1 + $0x3b8] sm:$0xff]
      %v353 = vld [vmem:[%s1 + $0x3c0] sm:$0xff]
      %v354 = vld [vmem:[%s1 + $0x3c8] sm:$0xff]
      %v355 = vld [vmem:[%s1 + $0x3d0] sm:$0xff]
      %v356 = vld [vmem:[%s1 + $0x3d8] sm:$0xff]
      %v357 = vld [vmem:[%s1 + $0x3e0] sm:$0xff]
      %v358 = vld [vmem:[%s1 + $0x3e8] sm:$0xff]
      %v359 = vld [vmem:[%s1 + $0x3f0] sm:$0xff]
      %v360 = vld [vmem:[%s1 + $0x3f8] sm:$0xff]
      %v361 = vld [vmem:[%s2] sm:$0x3]
      %v363 = vlaneseq
      %v364 = vshrl.u32 %v363, 7
      %v365 = vsub.s32 0, %v364
      %v366 = vrot.slane %v361, %v365
      %v367 = vlaneseq
      %v368 = vshrl.u32 %v367, 7
      %v369 = vsub.s32 1, %v368
      %v370 = vrot.slane %v361, %v369
      %v377 = vunpack.c.l.b16 %v229
      %v378 = vunpack.c.h.b16 %v229
      %v379 = vunpack.c.l.b16 %v230
      %v380 = vunpack.c.h.b16 %v230
      %v381 = vunpack.c.l.b16 %v231
      %v382 = vunpack.c.h.b16 %v231
      %v383 = vunpack.c.l.b16 %v232
      %v384 = vunpack.c.h.b16 %v232
      %v385 = vpack.c.b16 %v377, %v377
      %v386 = vpack.c.b16 %v378, %v378
      %v387 = vpack.c.b16 %v379, %v379
      %v388 = vpack.c.b16 %v380, %v380
      %v389 = vpack.c.b16 %v381, %v381
      %v390 = vpack.c.b16 %v382, %v382
      %v391 = vpack.c.b16 %v383, %v383
      %v392 = vpack.c.b16 %v384, %v384
      %v529 = vunpack.c.l.b16 %v233
      %v530 = vunpack.c.h.b16 %v233
      %v531 = vunpack.c.l.b16 %v234
      %v532 = vunpack.c.h.b16 %v234
      %v533 = vunpack.c.l.b16 %v235
      %v534 = vunpack.c.h.b16 %v235
      %v535 = vunpack.c.l.b16 %v236
      %v536 = vunpack.c.h.b16 %v236
      %v537 = vunpack.c.l.b16 %v237
      %v538 = vunpack.c.h.b16 %v237
      %v539 = vunpack.c.l.b16 %v238
      %v540 = vunpack.c.h.b16 %v238
      %v541 = vunpack.c.l.b16 %v239
      %v542 = vunpack.c.h.b16 %v239
      %v543 = vunpack.c.l.b16 %v240
      %v544 = vunpack.c.h.b16 %v240
      %v545 = vunpack.c.l.b16 %v241
      %v546 = vunpack.c.h.b16 %v241
      %v547 = vunpack.c.l.b16 %v242
      %v548 = vunpack.c.h.b16 %v242
      %v549 = vunpack.c.l.b16 %v243
      %v550 = vunpack.c.h.b16 %v243
      %v551 = vunpack.c.l.b16 %v244
      %v552 = vunpack.c.h.b16 %v244
      %v553 = vunpack.c.l.b16 %v245
      %v554 = vunpack.c.h.b16 %v245
      %v555 = vunpack.c.l.b16 %v246
      %v556 = vunpack.c.h.b16 %v246
      %v557 = vunpack.c.l.b16 %v247
      %v558 = vunpack.c.h.b16 %v247
      %v559 = vunpack.c.l.b16 %v248
      %v560 = vunpack.c.h.b16 %v248
      %v561 = vunpack.c.l.b16 %v249
      %v562 = vunpack.c.h.b16 %v249
      %v563 = vunpack.c.l.b16 %v250
      %v564 = vunpack.c.h.b16 %v250
      %v565 = vunpack.c.l.b16 %v251
      %v566 = vunpack.c.h.b16 %v251
      %v567 = vunpack.c.l.b16 %v252
      %v568 = vunpack.c.h.b16 %v252
      %v569 = vunpack.c.l.b16 %v253
      %v570 = vunpack.c.h.b16 %v253
      %v571 = vunpack.c.l.b16 %v254
      %v572 = vunpack.c.h.b16 %v254
      %v573 = vunpack.c.l.b16 %v255
      %v574 = vunpack.c.h.b16 %v255
      %v575 = vunpack.c.l.b16 %v256
      %v576 = vunpack.c.h.b16 %v256
      %v577 = vunpack.c.l.b16 %v257
      %v578 = vunpack.c.h.b16 %v257
      %v579 = vunpack.c.l.b16 %v258
      %v580 = vunpack.c.h.b16 %v258
      %v581 = vunpack.c.l.b16 %v259
      %v582 = vunpack.c.h.b16 %v259
      %v583 = vunpack.c.l.b16 %v260
      %v584 = vunpack.c.h.b16 %v260
      %v585 = vunpack.c.l.b16 %v261
      %v586 = vunpack.c.h.b16 %v261
      %v587 = vunpack.c.l.b16 %v262
      %v588 = vunpack.c.h.b16 %v262
      %v589 = vunpack.c.l.b16 %v263
      %v590 = vunpack.c.h.b16 %v263
      %v591 = vunpack.c.l.b16 %v264
      %v592 = vunpack.c.h.b16 %v264
      %v593 = vunpack.c.l.b16 %v265
      %v594 = vunpack.c.h.b16 %v265
      %v595 = vunpack.c.l.b16 %v266
      %v596 = vunpack.c.h.b16 %v266
      %v597 = vunpack.c.l.b16 %v267
      %v598 = vunpack.c.h.b16 %v267
      %v599 = vunpack.c.l.b16 %v268
      %v600 = vunpack.c.h.b16 %v268
      %v601 = vunpack.c.l.b16 %v269
      %v602 = vunpack.c.h.b16 %v269
      %v603 = vunpack.c.l.b16 %v270
      %v604 = vunpack.c.h.b16 %v270
      %v605 = vunpack.c.l.b16 %v271
      %v606 = vunpack.c.h.b16 %v271
      %v607 = vunpack.c.l.b16 %v272
      %v608 = vunpack.c.h.b16 %v272
      %v609 = vunpack.c.l.b16 %v273
      %v610 = vunpack.c.h.b16 %v273
      %v611 = vunpack.c.l.b16 %v274
      %v612 = vunpack.c.h.b16 %v274
      %v613 = vunpack.c.l.b16 %v275
      %v614 = vunpack.c.h.b16 %v275
      %v615 = vunpack.c.l.b16 %v276
      %v616 = vunpack.c.h.b16 %v276
      %v617 = vunpack.c.l.b16 %v277
      %v618 = vunpack.c.h.b16 %v277
      %v619 = vunpack.c.l.b16 %v278
      %v620 = vunpack.c.h.b16 %v278
      %v621 = vunpack.c.l.b16 %v279
      %v622 = vunpack.c.h.b16 %v279
      %v623 = vunpack.c.l.b16 %v280
      %v624 = vunpack.c.h.b16 %v280
      %v625 = vunpack.c.l.b16 %v281
      %v626 = vunpack.c.h.b16 %v281
      %v627 = vunpack.c.l.b16 %v282
      %v628 = vunpack.c.h.b16 %v282
      %v629 = vunpack.c.l.b16 %v283
      %v630 = vunpack.c.h.b16 %v283
      %v631 = vunpack.c.l.b16 %v284
      %v632 = vunpack.c.h.b16 %v284
      %v633 = vunpack.c.l.b16 %v285
      %v634 = vunpack.c.h.b16 %v285
      %v635 = vunpack.c.l.b16 %v286
      %v636 = vunpack.c.h.b16 %v286
      %v637 = vunpack.c.l.b16 %v287
      %v638 = vunpack.c.h.b16 %v287
      %v639 = vunpack.c.l.b16 %v288
      %v640 = vunpack.c.h.b16 %v288
      %v641 = vunpack.c.l.b16 %v289
      %v642 = vunpack.c.h.b16 %v289
      %v643 = vunpack.c.l.b16 %v290
      %v644 = vunpack.c.h.b16 %v290
      %v645 = vunpack.c.l.b16 %v291
      %v646 = vunpack.c.h.b16 %v291
      %v647 = vunpack.c.l.b16 %v292
      %v648 = vunpack.c.h.b16 %v292
      %v649 = vunpack.c.l.b16 %v293
      %v650 = vunpack.c.h.b16 %v293
      %v651 = vunpack.c.l.b16 %v294
      %v652 = vunpack.c.h.b16 %v294
      %v653 = vunpack.c.l.b16 %v295
      %v654 = vunpack.c.h.b16 %v295
      %v655 = vunpack.c.l.b16 %v296
      %v656 = vunpack.c.h.b16 %v296
      %v657 = vunpack.c.l.b16 %v297
      %v658 = vunpack.c.h.b16 %v297
      %v659 = vunpack.c.l.b16 %v298
      %v660 = vunpack.c.h.b16 %v298
      %v661 = vunpack.c.l.b16 %v299
      %v662 = vunpack.c.h.b16 %v299
      %v663 = vunpack.c.l.b16 %v300
      %v664 = vunpack.c.h.b16 %v300
      %v665 = vunpack.c.l.b16 %v301
      %v666 = vunpack.c.h.b16 %v301
      %v667 = vunpack.c.l.b16 %v302
      %v668 = vunpack.c.h.b16 %v302
      %v669 = vunpack.c.l.b16 %v303
      %v670 = vunpack.c.h.b16 %v303
      %v671 = vunpack.c.l.b16 %v304
      %v672 = vunpack.c.h.b16 %v304
      %v673 = vunpack.c.l.b16 %v305
      %v674 = vunpack.c.h.b16 %v305
      %v675 = vunpack.c.l.b16 %v306
      %v676 = vunpack.c.h.b16 %v306
      %v677 = vunpack.c.l.b16 %v307
      %v678 = vunpack.c.h.b16 %v307
      %v679 = vunpack.c.l.b16 %v308
      %v680 = vunpack.c.h.b16 %v308
      %v681 = vunpack.c.l.b16 %v309
      %v682 = vunpack.c.h.b16 %v309
      %v683 = vunpack.c.l.b16 %v310
      %v684 = vunpack.c.h.b16 %v310
      %v685 = vunpack.c.l.b16 %v311
      %v686 = vunpack.c.h.b16 %v311
      %v687 = vunpack.c.l.b16 %v312
      %v688 = vunpack.c.h.b16 %v312
      %v689 = vunpack.c.l.b16 %v313
      %v690 = vunpack.c.h.b16 %v313
      %v691 = vunpack.c.l.b16 %v314
      %v692 = vunpack.c.h.b16 %v314
      %v693 = vunpack.c.l.b16 %v315
      %v694 = vunpack.c.h.b16 %v315
      %v695 = vunpack.c.l.b16 %v316
      %v696 = vunpack.c.h.b16 %v316
      %v697 = vunpack.c.l.b16 %v317
      %v698 = vunpack.c.h.b16 %v317
      %v699 = vunpack.c.l.b16 %v318
      %v700 = vunpack.c.h.b16 %v318
      %v701 = vunpack.c.l.b16 %v319
      %v702 = vunpack.c.h.b16 %v319
      %v703 = vunpack.c.l.b16 %v320
      %v704 = vunpack.c.h.b16 %v320
      %v705 = vunpack.c.l.b16 %v321
      %v706 = vunpack.c.h.b16 %v321
      %v707 = vunpack.c.l.b16 %v322
      %v708 = vunpack.c.h.b16 %v322
      %v709 = vunpack.c.l.b16 %v323
      %v710 = vunpack.c.h.b16 %v323
      %v711 = vunpack.c.l.b16 %v324
      %v712 = vunpack.c.h.b16 %v324
      %v713 = vunpack.c.l.b16 %v325
      %v714 = vunpack.c.h.b16 %v325
      %v715 = vunpack.c.l.b16 %v326
      %v716 = vunpack.c.h.b16 %v326
      %v717 = vunpack.c.l.b16 %v327
      %v718 = vunpack.c.h.b16 %v327
      %v719 = vunpack.c.l.b16 %v328
      %v720 = vunpack.c.h.b16 %v328
      %v721 = vunpack.c.l.b16 %v329
      %v722 = vunpack.c.h.b16 %v329
      %v723 = vunpack.c.l.b16 %v330
      %v724 = vunpack.c.h.b16 %v330
      %v725 = vunpack.c.l.b16 %v331
      %v726 = vunpack.c.h.b16 %v331
      %v727 = vunpack.c.l.b16 %v332
      %v728 = vunpack.c.h.b16 %v332
      %v729 = vunpack.c.l.b16 %v333
      %v730 = vunpack.c.h.b16 %v333
      %v731 = vunpack.c.l.b16 %v334
      %v732 = vunpack.c.h.b16 %v334
      %v733 = vunpack.c.l.b16 %v335
      %v734 = vunpack.c.h.b16 %v335
      %v735 = vunpack.c.l.b16 %v336
      %v736 = vunpack.c.h.b16 %v336
      %v737 = vunpack.c.l.b16 %v337
      %v738 = vunpack.c.h.b16 %v337
      %v739 = vunpack.c.l.b16 %v338
      %v740 = vunpack.c.h.b16 %v338
      %v741 = vunpack.c.l.b16 %v339
      %v742 = vunpack.c.h.b16 %v339
      %v743 = vunpack.c.l.b16 %v340
      %v744 = vunpack.c.h.b16 %v340
      %v745 = vunpack.c.l.b16 %v341
      %v746 = vunpack.c.h.b16 %v341
      %v747 = vunpack.c.l.b16 %v342
      %v748 = vunpack.c.h.b16 %v342
      %v749 = vunpack.c.l.b16 %v343
      %v750 = vunpack.c.h.b16 %v343
      %v751 = vunpack.c.l.b16 %v344
      %v752 = vunpack.c.h.b16 %v344
      %v753 = vunpack.c.l.b16 %v345
      %v754 = vunpack.c.h.b16 %v345
      %v755 = vunpack.c.l.b16 %v346
      %v756 = vunpack.c.h.b16 %v346
      %v757 = vunpack.c.l.b16 %v347
      %v758 = vunpack.c.h.b16 %v347
      %v759 = vunpack.c.l.b16 %v348
      %v760 = vunpack.c.h.b16 %v348
      %v761 = vunpack.c.l.b16 %v349
      %v762 = vunpack.c.h.b16 %v349
      %v763 = vunpack.c.l.b16 %v350
      %v764 = vunpack.c.h.b16 %v350
      %v765 = vunpack.c.l.b16 %v351
      %v766 = vunpack.c.h.b16 %v351
      %v767 = vunpack.c.l.b16 %v352
      %v768 = vunpack.c.h.b16 %v352
      %v769 = vunpack.c.l.b16 %v353
      %v770 = vunpack.c.h.b16 %v353
      %v771 = vunpack.c.l.b16 %v354
      %v772 = vunpack.c.h.b16 %v354
      %v773 = vunpack.c.l.b16 %v355
      %v774 = vunpack.c.h.b16 %v355
      %v775 = vunpack.c.l.b16 %v356
      %v776 = vunpack.c.h.b16 %v356
      %v777 = vunpack.c.l.b16 %v357
      %v778 = vunpack.c.h.b16 %v357
      %v779 = vunpack.c.l.b16 %v358
      %v780 = vunpack.c.h.b16 %v358
      %v781 = vunpack.c.l.b16 %v359
      %v782 = vunpack.c.h.b16 %v359
      %v783 = vunpack.c.l.b16 %v360
      %v784 = vunpack.c.h.b16 %v360
      %v785 = vpack.c.b16 %v531, %v529
      %v786 = vpack.c.b16 %v532, %v530
      %v787 = vpack.c.b16 %v535, %v533
      %v788 = vpack.c.b16 %v536, %v534
      %v789 = vpack.c.b16 %v539, %v537
      %v790 = vpack.c.b16 %v540, %v538
      %v791 = vpack.c.b16 %v543, %v541
      %v792 = vpack.c.b16 %v544, %v542
      %v793 = vpack.c.b16 %v547, %v545
      %v794 = vpack.c.b16 %v548, %v546
      %v795 = vpack.c.b16 %v551, %v549
      %v796 = vpack.c.b16 %v552, %v550
      %v797 = vpack.c.b16 %v555, %v553
      %v798 = vpack.c.b16 %v556, %v554
      %v799 = vpack.c.b16 %v559, %v557
      %v800 = vpack.c.b16 %v560, %v558
      %v801 = vpack.c.b16 %v563, %v561
      %v802 = vpack.c.b16 %v564, %v562
      %v803 = vpack.c.b16 %v567, %v565
      %v804 = vpack.c.b16 %v568, %v566
      %v805 = vpack.c.b16 %v571, %v569
      %v806 = vpack.c.b16 %v572, %v570
      %v807 = vpack.c.b16 %v575, %v573
      %v808 = vpack.c.b16 %v576, %v574
      %v809 = vpack.c.b16 %v579, %v577
      %v810 = vpack.c.b16 %v580, %v578
      %v811 = vpack.c.b16 %v583, %v581
      %v812 = vpack.c.b16 %v584, %v582
      %v813 = vpack.c.b16 %v587, %v585
      %v814 = vpack.c.b16 %v588, %v586
      %v815 = vpack.c.b16 %v591, %v589
      %v816 = vpack.c.b16 %v592, %v590
      %v817 = vpack.c.b16 %v595, %v593
      %v818 = vpack.c.b16 %v596, %v594
      %v819 = vpack.c.b16 %v599, %v597
      %v820 = vpack.c.b16 %v600, %v598
      %v821 = vpack.c.b16 %v603, %v601
      %v822 = vpack.c.b16 %v604, %v602
      %v823 = vpack.c.b16 %v607, %v605
      %v824 = vpack.c.b16 %v608, %v606
      %v825 = vpack.c.b16 %v611, %v609
      %v826 = vpack.c.b16 %v612, %v610
      %v827 = vpack.c.b16 %v615, %v613
      %v828 = vpack.c.b16 %v616, %v614
      %v829 = vpack.c.b16 %v619, %v617
      %v830 = vpack.c.b16 %v620, %v618
      %v831 = vpack.c.b16 %v623, %v621
      %v832 = vpack.c.b16 %v624, %v622
      %v833 = vpack.c.b16 %v627, %v625
      %v834 = vpack.c.b16 %v628, %v626
      %v835 = vpack.c.b16 %v631, %v629
      %v836 = vpack.c.b16 %v632, %v630
      %v837 = vpack.c.b16 %v635, %v633
      %v838 = vpack.c.b16 %v636, %v634
      %v839 = vpack.c.b16 %v639, %v637
      %v840 = vpack.c.b16 %v640, %v638
      %v841 = vpack.c.b16 %v643, %v641
      %v842 = vpack.c.b16 %v644, %v642
      %v843 = vpack.c.b16 %v647, %v645
      %v844 = vpack.c.b16 %v648, %v646
      %v845 = vpack.c.b16 %v651, %v649
      %v846 = vpack.c.b16 %v652, %v650
      %v847 = vpack.c.b16 %v655, %v653
      %v848 = vpack.c.b16 %v656, %v654
      %v849 = vpack.c.b16 %v659, %v657
      %v850 = vpack.c.b16 %v660, %v658
      %v851 = vpack.c.b16 %v663, %v661
      %v852 = vpack.c.b16 %v664, %v662
      %v853 = vpack.c.b16 %v667, %v665
      %v854 = vpack.c.b16 %v668, %v666
      %v855 = vpack.c.b16 %v671, %v669
      %v856 = vpack.c.b16 %v672, %v670
      %v857 = vpack.c.b16 %v675, %v673
      %v858 = vpack.c.b16 %v676, %v674
      %v859 = vpack.c.b16 %v679, %v677
      %v860 = vpack.c.b16 %v680, %v678
      %v861 = vpack.c.b16 %v683, %v681
      %v862 = vpack.c.b16 %v684, %v682
      %v863 = vpack.c.b16 %v687, %v685
      %v864 = vpack.c.b16 %v688, %v686
      %v865 = vpack.c.b16 %v691, %v689
      %v866 = vpack.c.b16 %v692, %v690
      %v867 = vpack.c.b16 %v695, %v693
      %v868 = vpack.c.b16 %v696, %v694
      %v869 = vpack.c.b16 %v699, %v697
      %v870 = vpack.c.b16 %v700, %v698
      %v871 = vpack.c.b16 %v703, %v701
      %v872 = vpack.c.b16 %v704, %v702
      %v873 = vpack.c.b16 %v707, %v705
      %v874 = vpack.c.b16 %v708, %v706
      %v875 = vpack.c.b16 %v711, %v709
      %v876 = vpack.c.b16 %v712, %v710
      %v877 = vpack.c.b16 %v715, %v713
      %v878 = vpack.c.b16 %v716, %v714
      %v879 = vpack.c.b16 %v719, %v717
      %v880 = vpack.c.b16 %v720, %v718
      %v881 = vpack.c.b16 %v723, %v721
      %v882 = vpack.c.b16 %v724, %v722
      %v883 = vpack.c.b16 %v727, %v725
      %v884 = vpack.c.b16 %v728, %v726
      %v885 = vpack.c.b16 %v731, %v729
      %v886 = vpack.c.b16 %v732, %v730
      %v887 = vpack.c.b16 %v735, %v733
      %v888 = vpack.c.b16 %v736, %v734
      %v889 = vpack.c.b16 %v739, %v737
      %v890 = vpack.c.b16 %v740, %v738
      %v891 = vpack.c.b16 %v743, %v741
      %v892 = vpack.c.b16 %v744, %v742
      %v893 = vpack.c.b16 %v747, %v745
      %v894 = vpack.c.b16 %v748, %v746
      %v895 = vpack.c.b16 %v751, %v749
      %v896 = vpack.c.b16 %v752, %v750
      %v897 = vpack.c.b16 %v755, %v753
      %v898 = vpack.c.b16 %v756, %v754
      %v899 = vpack.c.b16 %v759, %v757
      %v900 = vpack.c.b16 %v760, %v758
      %v901 = vpack.c.b16 %v763, %v761
      %v902 = vpack.c.b16 %v764, %v762
      %v903 = vpack.c.b16 %v767, %v765
      %v904 = vpack.c.b16 %v768, %v766
      %v905 = vpack.c.b16 %v771, %v769
      %v906 = vpack.c.b16 %v772, %v770
      %v907 = vpack.c.b16 %v775, %v773
      %v908 = vpack.c.b16 %v776, %v774
      %v909 = vpack.c.b16 %v779, %v777
      %v910 = vpack.c.b16 %v780, %v778
      %v911 = vpack.c.b16 %v783, %v781
      %v912 = vpack.c.b16 %v784, %v782
      %1041 = vmatprep.subr.bf16.mxu0 %v786
      %1042 = vmatpush1.bf16.msra.mxu0 %v785
      %1043 = vmatprep.subr.bf16.mxu0 %v788
      %1044 = vmatpush1.bf16.msra.mxu0 %v787
      %1045 = vmatprep.subr.bf16.mxu0 %v790
      %1046 = vmatpush1.bf16.msra.mxu0 %v789
      %1047 = vmatprep.subr.bf16.mxu0 %v792
      %1048 = vmatpush1.bf16.msra.mxu0 %v791
      %1049 = vmatprep.subr.bf16.mxu0 %v794
      %1050 = vmatpush1.bf16.msra.mxu0 %v793
      %1051 = vmatprep.subr.bf16.mxu0 %v796
      %1052 = vmatpush1.bf16.msra.mxu0 %v795
      %1053 = vmatprep.subr.bf16.mxu0 %v798
      %1054 = vmatpush1.bf16.msra.mxu0 %v797
      %1055 = vmatprep.subr.bf16.mxu0 %v800
      %1056 = vmatpush1.bf16.msra.mxu0 %v799
      %1057 = vmatprep.subr.bf16.mxu0 %v802
      %1058 = vmatpush1.bf16.msra.mxu0 %v801
      %1059 = vmatprep.subr.bf16.mxu0 %v804
      %1060 = vmatpush1.bf16.msra.mxu0 %v803
      %1061 = vmatprep.subr.bf16.mxu0 %v806
      %1062 = vmatpush1.bf16.msra.mxu0 %v805
      %1063 = vmatprep.subr.bf16.mxu0 %v808
      %1064 = vmatpush1.bf16.msra.mxu0 %v807
      %1065 = vmatprep.subr.bf16.mxu0 %v810
      %1066 = vmatpush1.bf16.msra.mxu0 %v809
      %1067 = vmatprep.subr.bf16.mxu0 %v812
      %1068 = vmatpush1.bf16.msra.mxu0 %v811
      %1069 = vmatprep.subr.bf16.mxu0 %v814
      %1070 = vmatpush1.bf16.msra.mxu0 %v813
      %1071 = vmatprep.subr.bf16.mxu0 %v816
      %1072 = vmatpush1.bf16.msra.mxu0 %v815
      %1073 = vmatprep.mubr.bf16.mxu0 %v386
      %1074 = vmatmul.mubr.bf16.gmra.mrb[0].mxu0 %v385
      %v1075 = vpop.f32.mrb[0].mxu0
      %v1076 = vadd.f32 %v366, %v1075
      %v1077 = vpop.f32.mrb[0].mxu0
      %v1078 = vadd.f32 %v370, %v1077
      %v1079 = vpop.f32.mrb[0].mxu0
      %v1080 = vpop.f32.mrb[0].mxu0
      %1081 = vdwg.mxu0
      %1082 = vmatprep.subr.bf16.mxu0 %v818
      %1083 = vmatpush1.bf16.msra.mxu0 %v817
      %1084 = vmatprep.subr.bf16.mxu0 %v820
      %1085 = vmatpush1.bf16.msra.mxu0 %v819
      %1086 = vmatprep.subr.bf16.mxu0 %v822
      %1087 = vmatpush1.bf16.msra.mxu0 %v821
      %1088 = vmatprep.subr.bf16.mxu0 %v824
      %1089 = vmatpush1.bf16.msra.mxu0 %v823
      %1090 = vmatprep.subr.bf16.mxu0 %v826
      %1091 = vmatpush1.bf16.msra.mxu0 %v825
      %1092 = vmatprep.subr.bf16.mxu0 %v828
      %1093 = vmatpush1.bf16.msra.mxu0 %v827
      %1094 = vmatprep.subr.bf16.mxu0 %v830
      %1095 = vmatpush1.bf16.msra.mxu0 %v829
      %1096 = vmatprep.subr.bf16.mxu0 %v832
      %1097 = vmatpush1.bf16.msra.mxu0 %v831
      %1098 = vmatprep.subr.bf16.mxu0 %v834
      %1099 = vmatpush1.bf16.msra.mxu0 %v833
      %1100 = vmatprep.subr.bf16.mxu0 %v836
      %1101 = vmatpush1.bf16.msra.mxu0 %v835
      %1102 = vmatprep.subr.bf16.mxu0 %v838
      %1103 = vmatpush1.bf16.msra.mxu0 %v837
      %1104 = vmatprep.subr.bf16.mxu0 %v840
      %1105 = vmatpush1.bf16.msra.mxu0 %v839
      %1106 = vmatprep.subr.bf16.mxu0 %v842
      %1107 = vmatpush1.bf16.msra.mxu0 %v841
      %1108 = vmatprep.subr.bf16.mxu0 %v844
      %1109 = vmatpush1.bf16.msra.mxu0 %v843
      %1110 = vmatprep.subr.bf16.mxu0 %v846
      %1111 = vmatpush1.bf16.msra.mxu0 %v845
      %1112 = vmatprep.subr.bf16.mxu0 %v848
      %1113 = vmatpush1.bf16.msra.mxu0 %v847
      %1114 = vmatprep.mubr.bf16.mxu0 %v388
      %1115 = vmatmul.mubr.bf16.gmra.mrb[0].mxu0 %v387
      %v1116 = vpop.f32.mrb[0].mxu0
      %v1117 = vadd.f32 %v1076, %v1116
      %v1118 = vpop.f32.mrb[0].mxu0
      %v1119 = vadd.f32 %v1078, %v1118
      %v1120 = vpop.f32.mrb[0].mxu0
      %v1121 = vpop.f32.mrb[0].mxu0
      %1122 = vdwg.mxu0
      %1123 = vmatprep.subr.bf16.mxu0 %v850
      %1124 = vmatpush1.bf16.msra.mxu0 %v849
      %1125 = vmatprep.subr.bf16.mxu0 %v852
      %1126 = vmatpush1.bf16.msra.mxu0 %v851
      %1127 = vmatprep.subr.bf16.mxu0 %v854
      %1128 = vmatpush1.bf16.msra.mxu0 %v853
      %1129 = vmatprep.subr.bf16.mxu0 %v856
      %1130 = vmatpush1.bf16.msra.mxu0 %v855
      %1131 = vmatprep.subr.bf16.mxu0 %v858
      %1132 = vmatpush1.bf16.msra.mxu0 %v857
      %1133 = vmatprep.subr.bf16.mxu0 %v860
      %1134 = vmatpush1.bf16.msra.mxu0 %v859
      %1135 = vmatprep.subr.bf16.mxu0 %v862
      %1136 = vmatpush1.bf16.msra.mxu0 %v861
      %1137 = vmatprep.subr.bf16.mxu0 %v864
      %1138 = vmatpush1.bf16.msra.mxu0 %v863
      %1139 = vmatprep.subr.bf16.mxu0 %v866
      %1140 = vmatpush1.bf16.msra.mxu0 %v865
      %1141 = vmatprep.subr.bf16.mxu0 %v868
      %1142 = vmatpush1.bf16.msra.mxu0 %v867
      %1143 = vmatprep.subr.bf16.mxu0 %v870
      %1144 = vmatpush1.bf16.msra.mxu0 %v869
      %1145 = vmatprep.subr.bf16.mxu0 %v872
      %1146 = vmatpush1.bf16.msra.mxu0 %v871
      %1147 = vmatprep.subr.bf16.mxu0 %v874
      %1148 = vmatpush1.bf16.msra.mxu0 %v873
      %1149 = vmatprep.subr.bf16.mxu0 %v876
      %1150 = vmatpush1.bf16.msra.mxu0 %v875
      %1151 = vmatprep.subr.bf16.mxu0 %v878
      %1152 = vmatpush1.bf16.msra.mxu0 %v877
      %1153 = vmatprep.subr.bf16.mxu0 %v880
      %1154 = vmatpush1.bf16.msra.mxu0 %v879
      %1155 = vmatprep.mubr.bf16.mxu0 %v390
      %1156 = vmatmul.mubr.bf16.gmra.mrb[0].mxu0 %v389
      %v1157 = vpop.f32.mrb[0].mxu0
      %v1158 = vadd.f32 %v1117, %v1157
      %v1159 = vpop.f32.mrb[0].mxu0
      %v1160 = vadd.f32 %v1119, %v1159
      %v1161 = vpop.f32.mrb[0].mxu0
      %v1162 = vpop.f32.mrb[0].mxu0
      %1163 = vdwg.mxu0
      %1164 = vmatprep.subr.bf16.mxu0 %v882
      %1165 = vmatpush1.bf16.msra.mxu0 %v881
      %1166 = vmatprep.subr.bf16.mxu0 %v884
      %1167 = vmatpush1.bf16.msra.mxu0 %v883
      %1168 = vmatprep.subr.bf16.mxu0 %v886
      %1169 = vmatpush1.bf16.msra.mxu0 %v885
      %1170 = vmatprep.subr.bf16.mxu0 %v888
      %1171 = vmatpush1.bf16.msra.mxu0 %v887
      %1172 = vmatprep.subr.bf16.mxu0 %v890
      %1173 = vmatpush1.bf16.msra.mxu0 %v889
      %1174 = vmatprep.subr.bf16.mxu0 %v892
      %1175 = vmatpush1.bf16.msra.mxu0 %v891
      %1176 = vmatprep.subr.bf16.mxu0 %v894
      %1177 = vmatpush1.bf16.msra.mxu0 %v893
      %1178 = vmatprep.subr.bf16.mxu0 %v896
      %1179 = vmatpush1.bf16.msra.mxu0 %v895
      %1180 = vmatprep.subr.bf16.mxu0 %v898
      %1181 = vmatpush1.bf16.msra.mxu0 %v897
      %1182 = vmatprep.subr.bf16.mxu0 %v900
      %1183 = vmatpush1.bf16.msra.mxu0 %v899
      %1184 = vmatprep.subr.bf16.mxu0 %v902
      %1185 = vmatpush1.bf16.msra.mxu0 %v901
      %1186 = vmatprep.subr.bf16.mxu0 %v904
      %1187 = vmatpush1.bf16.msra.mxu0 %v903
      %1188 = vmatprep.subr.bf16.mxu0 %v906
      %1189 = vmatpush1.bf16.msra.mxu0 %v905
      %1190 = vmatprep.subr.bf16.mxu0 %v908
      %1191 = vmatpush1.bf16.msra.mxu0 %v907
      %1192 = vmatprep.subr.bf16.mxu0 %v910
      %1193 = vmatpush1.bf16.msra.mxu0 %v909
      %1194 = vmatprep.subr.bf16.mxu0 %v912
      %1195 = vmatpush1.bf16.msra.mxu0 %v911
      %1196 = vmatprep.mubr.bf16.mxu0 %v392
      %1197 = vmatmul.mubr.bf16.gmra.mrb[0].mxu0 %v391
      %v1198 = vpop.f32.mrb[0].mxu0
      %v1199 = vadd.f32 %v1158, %v1198
      %v1200 = vpop.f32.mrb[0].mxu0
      %v1201 = vadd.f32 %v1160, %v1200
      %v1202 = vpop.f32.mrb[0].mxu0
      %v1203 = vpop.f32.mrb[0].mxu0
      %1204 = vdwg.mxu0
      %v1205 = vxor.u32 %v1201, 2147483648
      %v1206 = vmul.f32 %v1205, 1.442695
      %v1207 = vpow.pop %v1206
      %v1208 = vadd.f32 %v1207, 1.0
      %v1209 = vrcp.pop %v1208
      %v1210 = vmul.f32 1.0, %v1209
      %v1211 = vmul.f32 %v1199, %v1210
      %s1212 = smul.u32 %s20, 2
      %s1213 = sadd.s32 %s1212, %s21
      %s1214 = smul.u32 %s1213, 8
      %v1215 = vlaneseq
      %v1216 = vshrl.u32 %v1215, 7
      %v1217 = vstv %s1214
      %v1218 = vadd.s32 %v1217, %v1216
      %vm1219 = vcmp.lt.s32.totalorder %v1218, 24
      %v1220 = vsel %vm1219, %v1211, -inf
      %v1221 = vld [vmem:[#allocation2] sm:$0x1]
      %v1222 = vrot.slane %v1220, 4
      %v1223 = vmax.f32 %v1220, %v1222
      %v1224 = vrot.slane %v1223, 2
      %v1225 = vmax.f32 %v1223, %v1224
      %v1226 = vrot.slane %v1225, 1
      %v1227 = vmax.f32 %v1225, %v1226
      %v1228 = vmax.f32 %v1221, %v1227
      %1229 = vst [vmem:[#allocation2] sm:$0x1] %v1228
      %p1230 = scmp.eq.s32.totalorder %s21, 1
      // Predicated region
      $region37: #{malconv_forward.1} parent=31 // pred_check
        %p1231 = pneg %p1230
      $region38: #{malconv_forward.1} parent=31 // pred_check_branch
        %1233 = sbr.rel (%p1231) target = $region40
      $region39: #{malconv_forward.1} parent=31 // pred_region
        %v1234 = vld [vmem:[#allocation2] sm:$0x1]
        %1235 = vst [vmem:[%s223] sm:$0x1] %v1234
      $region40: #{malconv_forward.1} parent=31 // pred_fallthru
        _
      %p1236 = scmp.lt.s32.totalorder %s20, 1
      %s1237 = scalar_select %p1236, %s20, 1
      %p1238 = scmp.lt.s32.totalorder %s19, 1
      %s1239 = scalar_select %p1238, %s19, 1
      %s1240 = smul.addr %s1237, 2
      %s1241 = sadd.s32 %s1239, %s1240
      %s1242 = scalar_lea.vmem %s3, %s1241
      // Predicated region
      $region41: #{malconv_forward.1} parent=31 // pred_check
        %p1243 = pneg %p129
      $region42: #{malconv_forward.1} parent=31 // pred_check_branch
        %1245 = sbr.rel (%p1243) target = $region44
      $region43: #{malconv_forward.1} parent=31 // pred_region
        _
      $region44: #{malconv_forward.1} parent=31 // pred_fallthru
        _
    $region32: #{malconv_forward.1} parent=5 // pred_fallthru
      _
    %p1246 = scmp.le.s32.totalorder 2, %s9
    // Predicated region
    $region45: #{malconv_forward.1} parent=5 // pred_check
      %p1247 = pneg %p1246
    $region46: #{malconv_forward.1} parent=5 // pred_check_branch
      %1249 = sbr.rel (%p1247) target = $region48
    $region47: #{malconv_forward.1} parent=5 // pred_region
      %s1250 = ssub.s32 %s9, 2
      // Predicated region
      $region49: #{malconv_forward.1} parent=47 // pred_check
        %p1251 = pneg %p135
      $region50: #{malconv_forward.1} parent=47 // pred_check_branch
        %1253 = sbr.rel (%p1251) target = $region52
      $region51: #{malconv_forward.1} parent=47 // pred_region
        %p1254 = scmp.lt.s32.totalorder %s23, 1
        %s1255 = scalar_select %p1254, %s23, 1
        %p1256 = scmp.lt.s32.totalorder %s22, 1
        %s1257 = scalar_select %p1256, %s22, 1
        %s1258 = smul.addr %s1255, 2
        %s1259 = sadd.s32 %s1257, %s1258
        %s1260 = scalar_lea.vmem %s3, %s1259
      $region52: #{malconv_forward.1} parent=47 // pred_fallthru
        _
    $region48: #{malconv_forward.1} parent=5 // pred_fallthru
      _
  $region6: #{malconv_forward.1} parent=0 // loop_footer
    %s13 = sadd.s32 1, %s9
  $region7: #{malconv_forward.1} parent=0 // loop_footer_branch
    %8 = sbr.rel target = $region3
  $region8: #{malconv_forward.1} parent=0 // loop_exit
    _

</llo_original>
